<compile_context>
chip_gen: v6e
topology: v6e:2x2x1
jax: 0.10.0
libtpu: 0.0.40
codegen_flags: <defaults>
</compile_context>

<pallas_src>
import math
import functools

import jax
import jax.numpy as jnp
from jax.experimental import pallas as pl
from jax.experimental.pallas import tpu as pltpu


def decoder_actor_kernel(x_ref, wg_ref, bg_ref, wn_ref, bn_ref,
                         wkq_ref, bkq_ref, o_ref, *, B, n, dm, C, scale):
    x = x_ref[...].astype(jnp.float32)                         # (B, n, dm)

    # graph embedding: per-batch max over nodes, then Linear (one (B,dm) dot)
    x_graph = jnp.max(x, axis=1)                               # (B, dm)
    lp_graph = jnp.dot(x_graph, wg_ref[...],
                       preferred_element_type=jnp.float32) + bg_ref[...]    # (B, dm)

    # node embedding: one (B*n, dm) @ (dm, dm) dot (leading-dim reshape is a
    # layout no-op since n is a multiple of the sublane tile)
    x2 = x.reshape(B * n, dm)
    lp_nodes = jnp.dot(x2, wn_ref[...],
                       preferred_element_type=jnp.float32) + bn_ref[...]    # (B*n, dm)

    h = lp_nodes.reshape(B, n, dm) + lp_graph[:, None, :]      # (B, n, dm)

    # fused K/Q projection: one (B*n, dm) @ (dm, 2*dm) dot
    kq = jnp.dot(h.reshape(B * n, dm), wkq_ref[...],
                 preferred_element_type=jnp.float32) + bkq_ref[...]         # (B*n, 2dm)
    K = kq[:, :dm].reshape(B, n, dm)
    Q = kq[:, dm:].reshape(B, n, dm)

    # per-batch scores M = K @ Q^T, scaled AFTER the matmul (matches reference)
    M = jnp.einsum('bid,bjd->bij', K, Q,
                   preferred_element_type=jnp.float32)                      # (B, n, n)
    M_hat = C * jnp.tanh(M * scale)

    # subtract 1e20 on each diagonal (self-transition mask)
    row = jax.lax.broadcasted_iota(jnp.int32, (B, n, n), 1)
    col = jax.lax.broadcasted_iota(jnp.int32, (B, n, n), 2)
    M_hat = jnp.where(row == col, M_hat - 1e20, M_hat)

    # softmax over the flattened n*n scores of each batch element
    # (reduce lanes then sublanes — identical math, no in-kernel reshape)
    m = jnp.max(jnp.max(M_hat, axis=2, keepdims=True), axis=1, keepdims=True)
    p = jnp.exp(M_hat - m)
    denom = jnp.sum(jnp.sum(p, axis=2, keepdims=True), axis=1, keepdims=True)
    sm = p / denom                                             # (B, n, n), exact div

    # pack into the lane-dense (B, n*n) output slab with static lane-offset
    # stores (avoids relying on a general (B,n,n)->(B,n*n) value relayout)
    for i in range(n):                                         # static, unrolled
        o_ref[:, pl.ds(i * n, n)] = sm[:, i, :].astype(o_ref.dtype)


def decoder_actor(x, params, *, C=10):
    """params: (wg, bg, wn, bn, wk, bk, wq, bq); weights stored (in, out)."""
    wg, bg, wn, bn, wk, bk, wq, bq = params
    B, n, dm = x.shape

    # Fuse K and Q projections into one lane-dense (dm, 2*dm) matmul
    # (trace-time concat, zero kernel cost; no scale folding).
    wkq = jnp.concatenate([wk, wq], axis=1)                    # (dm, 2*dm)
    bkq = jnp.concatenate([bk, bq], axis=1)                    # (1, 2*dm)

    vmem = lambda: pl.BlockSpec(memory_space=pltpu.MemorySpace.VMEM)

    out_flat = pl.pallas_call(
        functools.partial(decoder_actor_kernel, B=B, n=n, dm=dm,
                          C=float(C), scale=1.0 / math.sqrt(dm)),
        out_shape=jax.ShapeDtypeStruct((B, n * n), x.dtype),
        in_specs=[vmem() for _ in range(7)],
        out_specs=vmem(),
    )(x, wg, bg, wn, bn, wkq, bkq)

    return out_flat.reshape(B, n, n)


def decoder_actor_ref(x, params, *, C=10):
    """Pure-JAX reference mirroring the PyTorch forward."""
    wg, bg, wn, bn, wk, bk, wq, bq = params
    B, n, dm = x.shape
    hi = jax.lax.Precision.HIGHEST
    x_graph = jnp.max(x, axis=1)                                # (B, dm)
    lp_graph = jnp.dot(x_graph, wg, precision=hi) + bg          # (B, dm)
    lp_nodes = jnp.einsum('bnd,de->bne', x, wn, precision=hi) + bn
    h = lp_nodes + lp_graph[:, None, :]
    K = jnp.einsum('bnd,de->bne', h, wk, precision=hi) + bk
    Q = jnp.einsum('bnd,de->bne', h, wq, precision=hi) + bq
    M = jnp.einsum('bid,bjd->bij', K, Q, precision=hi) / math.sqrt(dm)
    M_hat = C * jnp.tanh(M) - jnp.eye(n, dtype=x.dtype) * 1e20
    sm = jax.nn.softmax(M_hat.reshape(B, n * n), axis=1)
    return sm.reshape(B, n, n)


def make_params(key, dm):
    ks = jax.random.split(key, 8)
    s = 0.1
    wg = jax.random.normal(ks[0], (dm, dm), jnp.float32) * s
    bg = jax.random.normal(ks[1], (1, dm), jnp.float32) * s
    wn = jax.random.normal(ks[2], (dm, dm), jnp.float32) * s
    bn = jax.random.normal(ks[3], (1, dm), jnp.float32) * s
    wk = jax.random.normal(ks[4], (dm, dm), jnp.float32) * s
    bk = jax.random.normal(ks[5], (1, dm), jnp.float32) * s
    wq = jax.random.normal(ks[6], (dm, dm), jnp.float32) * s
    bq = jax.random.normal(ks[7], (1, dm), jnp.float32) * s
    return (wg, bg, wn, bn, wk, bk, wq, bq)


if __name__ == "__main__":
    B, n, dm, C = 2, 8, 128, 10     # dm matches the module default (dm=128)

    key = jax.random.PRNGKey(0)
    kx, kp = jax.random.split(key)
    x = jax.random.normal(kx, (B, n, dm), jnp.float32)
    params = make_params(kp, dm)

    out = jax.block_until_ready(decoder_actor(x, params, C=C))
    ref = jax.block_until_ready(decoder_actor_ref(x, params, C=C))

    assert out.shape == (B, n, n)
    assert jnp.allclose(out, ref, atol=1e-5, rtol=1e-3), \
        float(jnp.max(jnp.abs(out - ref)))
    # each batch element's flattened softmax must sum to 1
    assert jnp.allclose(out.reshape(B, -1).sum(axis=1), 1.0, atol=1e-5)

    print("KERNEL_OK")
</pallas_src>

<mosaic_0001>
module attributes {stable_mosaic.version = 11 : i64} {
  func.func @decoder_actor_kernel(%arg0: memref<2x8x128xf32, #tpu.memory_space<vmem>>, %arg1: memref<128x128xf32, #tpu.memory_space<vmem>>, %arg2: memref<1x128xf32, #tpu.memory_space<vmem>>, %arg3: memref<128x128xf32, #tpu.memory_space<vmem>>, %arg4: memref<1x128xf32, #tpu.memory_space<vmem>>, %arg5: memref<128x256xf32, #tpu.memory_space<vmem>>, %arg6: memref<1x256xf32, #tpu.memory_space<vmem>>, %arg7: memref<2x64xf32, #tpu.memory_space<vmem>>) attributes {dimension_semantics = [], scalar_prefetch = 0 : i64, scratch_operands = 0 : i64, tpu.core_type = #tpu.core_type<tc>} {
    %c0 = arith.constant 0 : index
    %c0_0 = arith.constant 0 : index
    %c0_1 = arith.constant 0 : index
    %0 = vector.load %arg0[%c0, %c0_0, %c0_1] : memref<2x8x128xf32, #tpu.memory_space<vmem>>, vector<2x8x128xf32>
    %cst = arith.constant dense<0xFF800000> : vector<2x128xf32>
    %1 = vector.multi_reduction <maximumf>, %0, %cst [1] : vector<2x8x128xf32> to vector<2x128xf32>
    %c0_2 = arith.constant 0 : index
    %c0_3 = arith.constant 0 : index
    %2 = vector.load %arg1[%c0_2, %c0_3] : memref<128x128xf32, #tpu.memory_space<vmem>>, vector<128x128xf32>
    %cst_4 = arith.constant dense<0.000000e+00> : vector<2x128xf32>
    %3 = tpu.matmul %1, %2, %cst_4 {dimension_numbers = #tpu.dot_dimension_numbers<[1], [0], [0], [1], [0, 0, 1, 1], [], []>} : vector<2x128xf32>, vector<128x128xf32>, vector<2x128xf32> -> vector<2x128xf32>
    %c0_5 = arith.constant 0 : index
    %c0_6 = arith.constant 0 : index
    %4 = vector.load %arg2[%c0_5, %c0_6] : memref<1x128xf32, #tpu.memory_space<vmem>>, vector<1x128xf32>
    %5 = vector.broadcast %4 : vector<1x128xf32> to vector<2x128xf32>
    %6 = arith.addf %3, %5 : vector<2x128xf32>
    %7 = vector.shape_cast %0 : vector<2x8x128xf32> to vector<16x128xf32>
    %c0_7 = arith.constant 0 : index
    %c0_8 = arith.constant 0 : index
    %8 = vector.load %arg3[%c0_7, %c0_8] : memref<128x128xf32, #tpu.memory_space<vmem>>, vector<128x128xf32>
    %cst_9 = arith.constant dense<0.000000e+00> : vector<16x128xf32>
    %9 = tpu.matmul %7, %8, %cst_9 {dimension_numbers = #tpu.dot_dimension_numbers<[1], [0], [0], [1], [0, 0, 1, 1], [], []>} : vector<16x128xf32>, vector<128x128xf32>, vector<16x128xf32> -> vector<16x128xf32>
    %c0_10 = arith.constant 0 : index
    %c0_11 = arith.constant 0 : index
    %10 = vector.load %arg4[%c0_10, %c0_11] : memref<1x128xf32, #tpu.memory_space<vmem>>, vector<1x128xf32>
    %11 = vector.broadcast %10 : vector<1x128xf32> to vector<16x128xf32>
    %12 = arith.addf %9, %11 : vector<16x128xf32>
    %13 = vector.shape_cast %12 : vector<16x128xf32> to vector<2x8x128xf32>
    %14 = vector.shape_cast %6 : vector<2x128xf32> to vector<2x1x128xf32>
    %15 = vector.broadcast %14 : vector<2x1x128xf32> to vector<2x8x128xf32>
    %16 = arith.addf %13, %15 : vector<2x8x128xf32>
    %17 = vector.shape_cast %16 : vector<2x8x128xf32> to vector<16x128xf32>
    %c0_12 = arith.constant 0 : index
    %c0_13 = arith.constant 0 : index
    %18 = vector.load %arg5[%c0_12, %c0_13] : memref<128x256xf32, #tpu.memory_space<vmem>>, vector<128x256xf32>
    %cst_14 = arith.constant dense<0.000000e+00> : vector<16x256xf32>
    %19 = tpu.matmul %17, %18, %cst_14 {dimension_numbers = #tpu.dot_dimension_numbers<[1], [0], [0], [1], [0, 0, 1, 1], [], []>} : vector<16x128xf32>, vector<128x256xf32>, vector<16x256xf32> -> vector<16x256xf32>
    %c0_15 = arith.constant 0 : index
    %c0_16 = arith.constant 0 : index
    %20 = vector.load %arg6[%c0_15, %c0_16] : memref<1x256xf32, #tpu.memory_space<vmem>>, vector<1x256xf32>
    %21 = vector.broadcast %20 : vector<1x256xf32> to vector<16x256xf32>
    %22 = arith.addf %19, %21 : vector<16x256xf32>
    %23 = vector.extract_strided_slice %22 {offsets = [0, 0], sizes = [16, 128], strides = [1, 1]} : vector<16x256xf32> to vector<16x128xf32>
    %24 = vector.shape_cast %23 : vector<16x128xf32> to vector<2x8x128xf32>
    %25 = vector.extract_strided_slice %22 {offsets = [0, 128], sizes = [16, 128], strides = [1, 1]} : vector<16x256xf32> to vector<16x128xf32>
    %26 = vector.shape_cast %25 : vector<16x128xf32> to vector<2x8x128xf32>
    "tpu.trace_start"() <{level = 10 : i32, message = "bid,bjd->bij"}> : () -> ()
    %cst_17 = arith.constant dense<0.000000e+00> : vector<2x8x8xf32>
    %27 = tpu.matmul %24, %26, %cst_17 {dimension_numbers = #tpu.dot_dimension_numbers<[2], [2], [1], [1], [0, 0, 0, 1, 1, 1], [0], [0]>} : vector<2x8x128xf32>, vector<2x8x128xf32>, vector<2x8x8xf32> -> vector<2x8x8xf32>
    "tpu.trace_stop"() : () -> ()
    %cst_18 = arith.constant 0.0883883461 : f32
    %28 = vector.broadcast %cst_18 : f32 to vector<2x8x8xf32>
    %29 = arith.mulf %27, %28 : vector<2x8x8xf32>
    %30 = math.tanh %29 : vector<2x8x8xf32>
    %cst_19 = arith.constant 1.000000e+01 : f32
    %31 = vector.broadcast %cst_19 : f32 to vector<2x8x8xf32>
    %32 = arith.mulf %31, %30 : vector<2x8x8xf32>
    %33 = tpu.iota {dimensions = array<i32: 1>} : vector<2x8x8xi32>
    %34 = tpu.iota {dimensions = array<i32: 2>} : vector<2x8x8xi32>
    %35 = arith.cmpi eq, %33, %34 : vector<2x8x8xi32>
    %cst_20 = arith.constant 1.000000e+20 : f32
    %36 = vector.broadcast %cst_20 : f32 to vector<2x8x8xf32>
    %37 = arith.subf %32, %36 : vector<2x8x8xf32>
    %38 = arith.select %35, %37, %32 : vector<2x8x8xi1>, vector<2x8x8xf32>
    %cst_21 = arith.constant dense<0xFF800000> : vector<2x8xf32>
    %39 = vector.multi_reduction <maximumf>, %38, %cst_21 [2] : vector<2x8x8xf32> to vector<2x8xf32>
    %40 = vector.shape_cast %39 : vector<2x8xf32> to vector<2x8x1xf32>
    %cst_22 = arith.constant dense<0xFF800000> : vector<2x1xf32>
    %41 = vector.multi_reduction <maximumf>, %40, %cst_22 [1] : vector<2x8x1xf32> to vector<2x1xf32>
    %42 = vector.shape_cast %41 : vector<2x1xf32> to vector<2x1x1xf32>
    %43 = vector.broadcast %42 : vector<2x1x1xf32> to vector<2x8x8xf32>
    %44 = arith.subf %38, %43 : vector<2x8x8xf32>
    %45 = math.exp %44 : vector<2x8x8xf32>
    %cst_23 = arith.constant dense<0.000000e+00> : vector<2x8xf32>
    %46 = vector.multi_reduction <add>, %45, %cst_23 [2] : vector<2x8x8xf32> to vector<2x8xf32>
    %47 = vector.shape_cast %46 : vector<2x8xf32> to vector<2x8x1xf32>
    %cst_24 = arith.constant dense<0.000000e+00> : vector<2x1xf32>
    %48 = vector.multi_reduction <add>, %47, %cst_24 [1] : vector<2x8x1xf32> to vector<2x1xf32>
    %49 = vector.shape_cast %48 : vector<2x1xf32> to vector<2x1x1xf32>
    %50 = vector.broadcast %49 : vector<2x1x1xf32> to vector<2x8x8xf32>
    %51 = arith.divf %45, %50 : vector<2x8x8xf32>
    %52 = vector.extract_strided_slice %51 {offsets = [0, 0, 0], sizes = [2, 1, 8], strides = [1, 1, 1]} : vector<2x8x8xf32> to vector<2x1x8xf32>
    %53 = vector.shape_cast %52 : vector<2x1x8xf32> to vector<2x8xf32>
    %c0_25 = arith.constant 0 : index
    %c0_26 = arith.constant 0 : index
    %54 = vector.load %arg7[%c0_25, %c0_26] : memref<2x64xf32, #tpu.memory_space<vmem>>, vector<2x8xf32>
    tpu.vector_store %arg7[%c0_25, %c0_26], %53 {strides = array<i32>} : memref<2x64xf32, #tpu.memory_space<vmem>>, vector<2x8xf32>,
    %55 = vector.extract_strided_slice %51 {offsets = [0, 1, 0], sizes = [2, 1, 8], strides = [1, 1, 1]} : vector<2x8x8xf32> to vector<2x1x8xf32>
    %56 = vector.shape_cast %55 : vector<2x1x8xf32> to vector<2x8xf32>
    %c0_27 = arith.constant 0 : index
    %c8 = arith.constant 8 : index
    %57 = vector.load %arg7[%c0_27, %c8] : memref<2x64xf32, #tpu.memory_space<vmem>>, vector<2x8xf32>
    tpu.vector_store %arg7[%c0_27, %c8], %56 {strides = array<i32>} : memref<2x64xf32, #tpu.memory_space<vmem>>, vector<2x8xf32>,
    %58 = vector.extract_strided_slice %51 {offsets = [0, 2, 0], sizes = [2, 1, 8], strides = [1, 1, 1]} : vector<2x8x8xf32> to vector<2x1x8xf32>
    %59 = vector.shape_cast %58 : vector<2x1x8xf32> to vector<2x8xf32>
    %c0_28 = arith.constant 0 : index
    %c16 = arith.constant 16 : index
    %60 = vector.load %arg7[%c0_28, %c16] : memref<2x64xf32, #tpu.memory_space<vmem>>, vector<2x8xf32>
    tpu.vector_store %arg7[%c0_28, %c16], %59 {strides = array<i32>} : memref<2x64xf32, #tpu.memory_space<vmem>>, vector<2x8xf32>,
    %61 = vector.extract_strided_slice %51 {offsets = [0, 3, 0], sizes = [2, 1, 8], strides = [1, 1, 1]} : vector<2x8x8xf32> to vector<2x1x8xf32>
    %62 = vector.shape_cast %61 : vector<2x1x8xf32> to vector<2x8xf32>
    %c0_29 = arith.constant 0 : index
    %c24 = arith.constant 24 : index
    %63 = vector.load %arg7[%c0_29, %c24] : memref<2x64xf32, #tpu.memory_space<vmem>>, vector<2x8xf32>
    tpu.vector_store %arg7[%c0_29, %c24], %62 {strides = array<i32>} : memref<2x64xf32, #tpu.memory_space<vmem>>, vector<2x8xf32>,
    %64 = vector.extract_strided_slice %51 {offsets = [0, 4, 0], sizes = [2, 1, 8], strides = [1, 1, 1]} : vector<2x8x8xf32> to vector<2x1x8xf32>
    %65 = vector.shape_cast %64 : vector<2x1x8xf32> to vector<2x8xf32>
    %c0_30 = arith.constant 0 : index
    %c32 = arith.constant 32 : index
    %66 = vector.load %arg7[%c0_30, %c32] : memref<2x64xf32, #tpu.memory_space<vmem>>, vector<2x8xf32>
    tpu.vector_store %arg7[%c0_30, %c32], %65 {strides = array<i32>} : memref<2x64xf32, #tpu.memory_space<vmem>>, vector<2x8xf32>,
    %67 = vector.extract_strided_slice %51 {offsets = [0, 5, 0], sizes = [2, 1, 8], strides = [1, 1, 1]} : vector<2x8x8xf32> to vector<2x1x8xf32>
    %68 = vector.shape_cast %67 : vector<2x1x8xf32> to vector<2x8xf32>
    %c0_31 = arith.constant 0 : index
    %c40 = arith.constant 40 : index
    %69 = vector.load %arg7[%c0_31, %c40] : memref<2x64xf32, #tpu.memory_space<vmem>>, vector<2x8xf32>
    tpu.vector_store %arg7[%c0_31, %c40], %68 {strides = array<i32>} : memref<2x64xf32, #tpu.memory_space<vmem>>, vector<2x8xf32>,
    %70 = vector.extract_strided_slice %51 {offsets = [0, 6, 0], sizes = [2, 1, 8], strides = [1, 1, 1]} : vector<2x8x8xf32> to vector<2x1x8xf32>
    %71 = vector.shape_cast %70 : vector<2x1x8xf32> to vector<2x8xf32>
    %c0_32 = arith.constant 0 : index
    %c48 = arith.constant 48 : index
    %72 = vector.load %arg7[%c0_32, %c48] : memref<2x64xf32, #tpu.memory_space<vmem>>, vector<2x8xf32>
    tpu.vector_store %arg7[%c0_32, %c48], %71 {strides = array<i32>} : memref<2x64xf32, #tpu.memory_space<vmem>>, vector<2x8xf32>,
    %73 = vector.extract_strided_slice %51 {offsets = [0, 7, 0], sizes = [2, 1, 8], strides = [1, 1, 1]} : vector<2x8x8xf32> to vector<2x1x8xf32>
    %74 = vector.shape_cast %73 : vector<2x1x8xf32> to vector<2x8xf32>
    %c0_33 = arith.constant 0 : index
    %c56 = arith.constant 56 : index
    %75 = vector.load %arg7[%c0_33, %c56] : memref<2x64xf32, #tpu.memory_space<vmem>>, vector<2x8xf32>
    tpu.vector_store %arg7[%c0_33, %c56], %74 {strides = array<i32>} : memref<2x64xf32, #tpu.memory_space<vmem>>, vector<2x8xf32>,
    return
  }
}

</mosaic_0001>

<llo_original>
// kernel: tpu_custom_call.1
$region0: #{tpu_custom_call.1}
  #allocation0 [shape = 'u32[]', space=smem, size = 0x4, offset = 0x4, fixed_abs, tag = 'smem constant byte address 0x4 - core index']
  #allocation1 [shape = 'u32[144,128]{1,0:T(1,128)}', space=vmem, size = 0x12000, scoped, tag = 'internal scratch']
  %s0 = inlined_call_operand.hbm [shape: f32[2,8,128], index: 0, kind: input, shape index: {}]
  %s1 = inlined_call_operand.hbm [shape: f32[128,128], index: 1, kind: input, shape index: {}]
  %s2 = inlined_call_operand.vmem [shape: f32[1,128], index: 2, kind: input, shape index: {}]
  %s3 = inlined_call_operand.hbm [shape: f32[128,128], index: 3, kind: input, shape index: {}]
  %s4 = inlined_call_operand.vmem [shape: f32[1,128], index: 4, kind: input, shape index: {}]
  %s5 = inlined_call_operand.hbm [shape: f32[128,256], index: 5, kind: input, shape index: {}]
  %s6 = inlined_call_operand.vmem [shape: f32[1,256], index: 6, kind: input, shape index: {}]
  %s7 = inlined_call_operand.hbm [shape: f32[2,64], index: 7, kind: output, shape index: {}]
  %s8 = sld [smem:[#allocation0]]
  $region54: #{tpu_custom_call.1} parent=0
    _
  %s10 = ssub.s32 1, %s8
  %s11 = scalar_select 0, %s10, %s8
  $region1: #{tpu_custom_call.1} parent=0
    #allocation2 [shape = 'u8[8192]{0}', space=vmem, size = 0x2000, scoped, tag = 'input window, operand 0, single buffered']
    #allocation3 [shape = 's32[1]{0}', space=sflag, size = 0x4, scoped, tag = 'scoped memory for tpu_custom_call.1']
    #allocation4 [shape = 's32[1]{0}', space=sflag, size = 0x4, scoped, tag = 'scoped memory for tpu_custom_call.1']
    #allocation5 [shape = 'u8[65536]{0}', space=vmem, size = 0x10000, scoped, tag = 'input window, operand 1, single buffered']
    #allocation6 [shape = 's32[1]{0}', space=sflag, size = 0x4, scoped, tag = 'scoped memory for tpu_custom_call.1']
    #allocation7 [shape = 'u8[65536]{0}', space=vmem, size = 0x10000, scoped, tag = 'input window, operand 3, single buffered']
    #allocation8 [shape = 'u8[131072]{0}', space=vmem, size = 0x20000, scoped, tag = 'input window, operand 5, single buffered']
    #allocation9 [shape = 's32[1]{0}', space=sflag, size = 0x4, scoped, tag = 'scoped memory for tpu_custom_call.1']
    #allocation10 [shape = 'u8[1024]{0}', space=vmem, size = 0x400, scoped, tag = 'output window, operand 0, single buffered']
    %12 = vsyncpa [#allocation3], 0
    %13 = vsyncpa [#allocation6], 0
    %14 = vsyncpa [#allocation9], 0
    %15 = vsyncpa [#allocation4], 0
    // Predicated region
    $region2: #{tpu_custom_call.1} parent=1 // pred_check
      _
    $region3: #{tpu_custom_call.1} parent=1 // pred_check_branch
      %17 = sbr.rel (0) target = $region5
    $region4: #{tpu_custom_call.1} parent=1 // pred_region
      %s19 = ssub.s32 256, 256
      %20 = vsyncadd [#allocation3], %s19
      %s21 = sshll.u32 [#allocation2], 4
      %s22 = int_to_ptr.vmem [resolvable:$true] %s21
      %27 = dma.hbm_to_vmem [thread:$0]  %s0, 256, %s22, [#allocation3], 128, 128, 8
    $region5: #{tpu_custom_call.1} parent=1 // pred_fallthru
      _
    // Predicated region
    $region6: #{tpu_custom_call.1} parent=1 // pred_check
      _
    $region7: #{tpu_custom_call.1} parent=1 // pred_check_branch
      %29 = sbr.rel (0) target = $region9
    $region8: #{tpu_custom_call.1} parent=1 // pred_region
      %s31 = ssub.s32 2048, 2048
      %32 = vsyncadd [#allocation6], %s31
      %s33 = sshll.u32 [#allocation5], 4
      %s34 = int_to_ptr.vmem [resolvable:$true] %s33
      %39 = dma.hbm_to_vmem [thread:$0]  %s1, 2048, %s34, [#allocation6], 128, 128, 8
    $region9: #{tpu_custom_call.1} parent=1 // pred_fallthru
      _
    // Predicated region
    $region10: #{tpu_custom_call.1} parent=1 // pred_check
      _
    $region11: #{tpu_custom_call.1} parent=1 // pred_check_branch
      %41 = sbr.rel (0) target = $region13
    $region12: #{tpu_custom_call.1} parent=1 // pred_region
      _
    $region13: #{tpu_custom_call.1} parent=1 // pred_fallthru
      _
    // Predicated region
    $region14: #{tpu_custom_call.1} parent=1 // pred_check
      _
    $region15: #{tpu_custom_call.1} parent=1 // pred_check_branch
      %43 = sbr.rel (0) target = $region17
    $region16: #{tpu_custom_call.1} parent=1 // pred_region
      %s45 = ssub.s32 2048, 2048
      %46 = vsyncadd [#allocation6], %s45
      %s47 = sshll.u32 [#allocation7], 4
      %s48 = int_to_ptr.vmem [resolvable:$true] %s47
      %53 = dma.hbm_to_vmem [thread:$0]  %s3, 2048, %s48, [#allocation6], 128, 128, 8
    $region17: #{tpu_custom_call.1} parent=1 // pred_fallthru
      _
    // Predicated region
    $region18: #{tpu_custom_call.1} parent=1 // pred_check
      _
    $region19: #{tpu_custom_call.1} parent=1 // pred_check_branch
      %55 = sbr.rel (0) target = $region21
    $region20: #{tpu_custom_call.1} parent=1 // pred_region
      _
    $region21: #{tpu_custom_call.1} parent=1 // pred_fallthru
      _
    // Predicated region
    $region22: #{tpu_custom_call.1} parent=1 // pred_check
      _
    $region23: #{tpu_custom_call.1} parent=1 // pred_check_branch
      %57 = sbr.rel (0) target = $region25
    $region24: #{tpu_custom_call.1} parent=1 // pred_region
      %s59 = ssub.s32 4096, 4096
      %60 = vsyncadd [#allocation9], %s59
      %s61 = sshll.u32 [#allocation8], 4
      %s62 = int_to_ptr.vmem [resolvable:$true] %s61
      %67 = dma.hbm_to_vmem [thread:$0]  %s5, 4096, %s62, [#allocation9], 256, 256, 16
    $region25: #{tpu_custom_call.1} parent=1 // pred_fallthru
      _
    // Predicated region
    $region26: #{tpu_custom_call.1} parent=1 // pred_check
      _
    $region27: #{tpu_custom_call.1} parent=1 // pred_check_branch
      %69 = sbr.rel (0) target = $region29
    $region28: #{tpu_custom_call.1} parent=1 // pred_region
      _
    $region29: #{tpu_custom_call.1} parent=1 // pred_fallthru
      _
    // Predicated region
    $region30: #{tpu_custom_call.1} parent=1 // pred_check
      _
    $region31: #{tpu_custom_call.1} parent=1 // pred_check_branch
      %71 = sbr.rel (0) target = $region33
    $region32: #{tpu_custom_call.1} parent=1 // pred_region
      %72 = dma.done [#allocation3], 256
    $region33: #{tpu_custom_call.1} parent=1 // pred_fallthru
      _
    // Predicated region
    $region34: #{tpu_custom_call.1} parent=1 // pred_check
      _
    $region35: #{tpu_custom_call.1} parent=1 // pred_check_branch
      %74 = sbr.rel (0) target = $region37
    $region36: #{tpu_custom_call.1} parent=1 // pred_region
      %75 = dma.done [#allocation6], 2048
    $region37: #{tpu_custom_call.1} parent=1 // pred_fallthru
      _
    // Predicated region
    $region38: #{tpu_custom_call.1} parent=1 // pred_check
      _
    $region39: #{tpu_custom_call.1} parent=1 // pred_check_branch
      %77 = sbr.rel (0) target = $region41
    $region40: #{tpu_custom_call.1} parent=1 // pred_region
      %78 = dma.done [#allocation6], 2048
    $region41: #{tpu_custom_call.1} parent=1 // pred_fallthru
      _
    // Predicated region
    $region42: #{tpu_custom_call.1} parent=1 // pred_check
      _
    $region43: #{tpu_custom_call.1} parent=1 // pred_check_branch
      %80 = sbr.rel (0) target = $region45
    $region44: #{tpu_custom_call.1} parent=1 // pred_region
      %81 = dma.done [#allocation9], 4096
    $region45: #{tpu_custom_call.1} parent=1 // pred_fallthru
      _
    %v82 = vld [vmem:[#allocation2] sm:$0xff]
    %v83 = vld [vmem:[#allocation2 + $0x8] sm:$0xff]
    %v84 = vrot.slane %v82, 4
    %v85 = vmax.f32 %v82, %v84
    %v86 = vrot.slane %v85, 2
    %v87 = vmax.f32 %v85, %v86
    %v88 = vrot.slane %v87, 1
    %v89 = vmax.f32 %v87, %v88
    %v90 = vrot.slane %v83, 4
    %v91 = vmax.f32 %v83, %v90
    %v92 = vrot.slane %v91, 2
    %v93 = vmax.f32 %v91, %v92
    %v94 = vrot.slane %v93, 1
    %v95 = vmax.f32 %v93, %v94
    %v96 = vld [vmem:[#allocation5] sm:$0xff]
    %v97 = vld [vmem:[#allocation5 + $0x8] sm:$0xff]
    %v98 = vld [vmem:[#allocation5 + $0x10] sm:$0xff]
    %v99 = vld [vmem:[#allocation5 + $0x18] sm:$0xff]
    %v100 = vld [vmem:[#allocation5 + $0x20] sm:$0xff]
    %v101 = vld [vmem:[#allocation5 + $0x28] sm:$0xff]
    %v102 = vld [vmem:[#allocation5 + $0x30] sm:$0xff]
    %v103 = vld [vmem:[#allocation5 + $0x38] sm:$0xff]
    %v104 = vld [vmem:[#allocation5 + $0x40] sm:$0xff]
    %v105 = vld [vmem:[#allocation5 + $0x48] sm:$0xff]
    %v106 = vld [vmem:[#allocation5 + $0x50] sm:$0xff]
    %v107 = vld [vmem:[#allocation5 + $0x58] sm:$0xff]
    %v108 = vld [vmem:[#allocation5 + $0x60] sm:$0xff]
    %v109 = vld [vmem:[#allocation5 + $0x68] sm:$0xff]
    %v110 = vld [vmem:[#allocation5 + $0x70] sm:$0xff]
    %v111 = vld [vmem:[#allocation5 + $0x78] sm:$0xff]
    %v112 = vld [vmem:[%s2] sm:$0x1]
    %v114 = vlaneseq
    %v115 = vshrl.u32 %v114, 7
    %v116 = vsub.s32 0, %v115
    %v117 = vrot.slane %v112, %v116
    %vm121 = vcmask 1041409
    %v122 = vsel %vm121, %v95, %v89
    %124 = vmatprep.subr.mxu0 0.0
    %125 = vmatpush1.msra.mxu0 %v111
    %126 = vmatprep.subr.mxu0 0.0
    %127 = vmatpush1.msra.mxu0 %v110
    %128 = vmatprep.subr.mxu0 0.0
    %129 = vmatpush1.msra.mxu0 %v109
    %130 = vmatprep.subr.mxu0 0.0
    %131 = vmatpush1.msra.mxu0 %v108
    %132 = vmatprep.subr.mxu0 0.0
    %133 = vmatpush1.msra.mxu0 %v107
    %134 = vmatprep.subr.mxu0 0.0
    %135 = vmatpush1.msra.mxu0 %v106
    %136 = vmatprep.subr.mxu0 0.0
    %137 = vmatpush1.msra.mxu0 %v105
    %138 = vmatprep.subr.mxu0 0.0
    %139 = vmatpush1.msra.mxu0 %v104
    %140 = vmatprep.subr.mxu0 0.0
    %141 = vmatpush1.msra.mxu0 %v103
    %142 = vmatprep.subr.mxu0 0.0
    %143 = vmatpush1.msra.mxu0 %v102
    %144 = vmatprep.subr.mxu0 0.0
    %145 = vmatpush1.msra.mxu0 %v101
    %146 = vmatprep.subr.mxu0 0.0
    %147 = vmatpush1.msra.mxu0 %v100
    %148 = vmatprep.subr.mxu0 0.0
    %149 = vmatpush1.msra.mxu0 %v99
    %150 = vmatprep.subr.mxu0 0.0
    %151 = vmatpush1.msra.mxu0 %v98
    %152 = vmatprep.subr.mxu0 0.0
    %153 = vmatpush1.msra.mxu0 %v97
    %154 = vmatprep.subr.mxu0 0.0
    %155 = vmatpush1.msra.mxu0 %v96
    %156 = vmatprep.subr.mxu0 0.0
    %157 = vmatpush2.msra.mxu0 0.0
    %158 = vmatprep.subr.mxu0 0.0
    %159 = vmatpush2.msra.mxu0 0.0
    %160 = vmatprep.subr.mxu0 0.0
    %161 = vmatpush2.msra.mxu0 0.0
    %162 = vmatprep.subr.mxu0 0.0
    %163 = vmatpush2.msra.mxu0 0.0
    %164 = vmatprep.subr.mxu0 0.0
    %165 = vmatpush2.msra.mxu0 0.0
    %166 = vmatprep.subr.mxu0 0.0
    %167 = vmatpush2.msra.mxu0 0.0
    %168 = vmatprep.subr.mxu0 0.0
    %169 = vmatpush2.msra.mxu0 0.0
    %170 = vmatprep.subr.mxu0 0.0
    %171 = vmatpush2.msra.mxu0 0.0
    %172 = vmatprep.subr.mxu0 0.0
    %173 = vmatpush2.msra.mxu0 0.0
    %174 = vmatprep.subr.mxu0 0.0
    %175 = vmatpush2.msra.mxu0 0.0
    %176 = vmatprep.subr.mxu0 0.0
    %177 = vmatpush2.msra.mxu0 0.0
    %178 = vmatprep.subr.mxu0 0.0
    %179 = vmatpush2.msra.mxu0 0.0
    %180 = vmatprep.subr.mxu0 0.0
    %181 = vmatpush2.msra.mxu0 0.0
    %182 = vmatprep.subr.mxu0 0.0
    %183 = vmatpush2.msra.mxu0 0.0
    %184 = vmatprep.subr.mxu0 0.0
    %185 = vmatpush2.msra.mxu0 0.0
    %186 = vmatprep.subr.mxu0 0.0
    %187 = vmatpush2.msra.mxu0 0.0
    %188 = vmatprep.mubr.f32.mxu0 0.0
    %189 = vmatmul.mubr.f32.gmra.mxu0 %v122
    %v190 = vpop.f32.mrf.mxu0
    %v191 = vadd.f32 %v117, %v190
    %v192 = vpop.f32.mrf.mxu0
    %193 = vdwg.mxu0
    %v194 = vld [vmem:[#allocation7] sm:$0xff]
    %v195 = vld [vmem:[#allocation7 + $0x8] sm:$0xff]
    %v196 = vld [vmem:[#allocation7 + $0x10] sm:$0xff]
    %v197 = vld [vmem:[#allocation7 + $0x18] sm:$0xff]
    %v198 = vld [vmem:[#allocation7 + $0x20] sm:$0xff]
    %v199 = vld [vmem:[#allocation7 + $0x28] sm:$0xff]
    %v200 = vld [vmem:[#allocation7 + $0x30] sm:$0xff]
    %v201 = vld [vmem:[#allocation7 + $0x38] sm:$0xff]
    %v202 = vld [vmem:[#allocation7 + $0x40] sm:$0xff]
    %v203 = vld [vmem:[#allocation7 + $0x48] sm:$0xff]
    %v204 = vld [vmem:[#allocation7 + $0x50] sm:$0xff]
    %v205 = vld [vmem:[#allocation7 + $0x58] sm:$0xff]
    %v206 = vld [vmem:[#allocation7 + $0x60] sm:$0xff]
    %v207 = vld [vmem:[#allocation7 + $0x68] sm:$0xff]
    %v208 = vld [vmem:[#allocation7 + $0x70] sm:$0xff]
    %v209 = vld [vmem:[#allocation7 + $0x78] sm:$0xff]
    %v210 = vld [vmem:[%s4] sm:$0x1]
    %v212 = vlaneseq
    %v213 = vshrl.u32 %v212, 7
    %v214 = vsub.s32 0, %v213
    %v215 = vrot.slane %v210, %v214
    %217 = vmatprep.subr.mxu0 0.0
    %218 = vmatpush1.msra.mxu0 %v209
    %219 = vmatprep.subr.mxu0 0.0
    %220 = vmatpush1.msra.mxu0 %v208
    %221 = vmatprep.subr.mxu0 0.0
    %222 = vmatpush1.msra.mxu0 %v207
    %223 = vmatprep.subr.mxu0 0.0
    %224 = vmatpush1.msra.mxu0 %v206
    %225 = vmatprep.subr.mxu0 0.0
    %226 = vmatpush1.msra.mxu0 %v205
    %227 = vmatprep.subr.mxu0 0.0
    %228 = vmatpush1.msra.mxu0 %v204
    %229 = vmatprep.subr.mxu0 0.0
    %230 = vmatpush1.msra.mxu0 %v203
    %231 = vmatprep.subr.mxu0 0.0
    %232 = vmatpush1.msra.mxu0 %v202
    %233 = vmatprep.subr.mxu0 0.0
    %234 = vmatpush1.msra.mxu0 %v201
    %235 = vmatprep.subr.mxu0 0.0
    %236 = vmatpush1.msra.mxu0 %v200
    %237 = vmatprep.subr.mxu0 0.0
    %238 = vmatpush1.msra.mxu0 %v199
    %239 = vmatprep.subr.mxu0 0.0
    %240 = vmatpush1.msra.mxu0 %v198
    %241 = vmatprep.subr.mxu0 0.0
    %242 = vmatpush1.msra.mxu0 %v197
    %243 = vmatprep.subr.mxu0 0.0
    %244 = vmatpush1.msra.mxu0 %v196
    %245 = vmatprep.subr.mxu0 0.0
    %246 = vmatpush1.msra.mxu0 %v195
    %247 = vmatprep.subr.mxu0 0.0
    %248 = vmatpush1.msra.mxu0 %v194
    %249 = vmatprep.subr.mxu0 0.0
    %250 = vmatpush2.msra.mxu0 0.0
    %251 = vmatprep.subr.mxu0 0.0
    %252 = vmatpush2.msra.mxu0 0.0
    %253 = vmatprep.subr.mxu0 0.0
    %254 = vmatpush2.msra.mxu0 0.0
    %255 = vmatprep.subr.mxu0 0.0
    %256 = vmatpush2.msra.mxu0 0.0
    %257 = vmatprep.subr.mxu0 0.0
    %258 = vmatpush2.msra.mxu0 0.0
    %259 = vmatprep.subr.mxu0 0.0
    %260 = vmatpush2.msra.mxu0 0.0
    %261 = vmatprep.subr.mxu0 0.0
    %262 = vmatpush2.msra.mxu0 0.0
    %263 = vmatprep.subr.mxu0 0.0
    %264 = vmatpush2.msra.mxu0 0.0
    %265 = vmatprep.subr.mxu0 0.0
    %266 = vmatpush2.msra.mxu0 0.0
    %267 = vmatprep.subr.mxu0 0.0
    %268 = vmatpush2.msra.mxu0 0.0
    %269 = vmatprep.subr.mxu0 0.0
    %270 = vmatpush2.msra.mxu0 0.0
    %271 = vmatprep.subr.mxu0 0.0
    %272 = vmatpush2.msra.mxu0 0.0
    %273 = vmatprep.subr.mxu0 0.0
    %274 = vmatpush2.msra.mxu0 0.0
    %275 = vmatprep.subr.mxu0 0.0
    %276 = vmatpush2.msra.mxu0 0.0
    %277 = vmatprep.subr.mxu0 0.0
    %278 = vmatpush2.msra.mxu0 0.0
    %279 = vmatprep.subr.mxu0 0.0
    %280 = vmatpush2.msra.mxu0 0.0
    %281 = vmatprep.mubr.f32.mxu0 0.0
    %282 = vmatmul.mubr.f32.gmra.mxu0 %v82
    %v283 = vpop.f32.mrf.mxu0
    %v284 = vadd.f32 %v215, %v283
    %v285 = vpop.f32.mrf.mxu0
    %286 = vmatprep.mubr.f32.mxu0 0.0
    %287 = vmatmul.mubr.f32.gmra.mxu0 %v83
    %v288 = vpop.f32.mrf.mxu0
    %v289 = vadd.f32 %v215, %v288
    %v290 = vpop.f32.mrf.mxu0
    %291 = vdwg.mxu0
    %v294 = vunpack.c.l.s4 1966171168
    %v295 = vunpack.c.0.s8 %v294
    %v296 = vlaneseq
    %v297 = vshrl.u32 %v296, 7
    %v298 = vsub.s32 %v295, %v297
    %v299 = vrot.slane %v191, %v298
    %v300 = vcombine.high %v299, %v299
    %v302 = vunpack.c.l.s4 1966171168
    %v303 = vunpack.c.0.s8 %v302
    %v304 = vlaneseq
    %v305 = vshrl.u32 %v304, 7
    %v306 = vsub.s32 %v303, %v305
    %v307 = vrot.slane %v299, %v306
    %v309 = vunpack.c.l.s4 1966171168
    %v310 = vunpack.c.0.s8 %v309
    %v311 = vlaneseq
    %v312 = vshrl.u32 %v311, 7
    %v313 = vsub.s32 %v310, %v312
    %v314 = vrot.slane %v300, %v313
    %v315 = vlaneseq
    %v316 = vshrl.u32 %v315, 7
    %v317 = vsub.s32 0, %v316
    %v318 = vrot.slane %v307, %v317
    %v319 = vlaneseq
    %v320 = vshrl.u32 %v319, 7
    %v321 = vsub.s32 0, %v320
    %v322 = vrot.slane %v314, %v321
    %v325 = vadd.f32 %v284, %v318
    %v326 = vadd.f32 %v289, %v322
    %v327 = vld [vmem:[#allocation8] sm:$0xff]
    %v328 = vld [vmem:[#allocation8 + $0x8] sm:$0xff]
    %v329 = vld [vmem:[#allocation8 + $0x10] sm:$0xff]
    %v330 = vld [vmem:[#allocation8 + $0x18] sm:$0xff]
    %v331 = vld [vmem:[#allocation8 + $0x20] sm:$0xff]
    %v332 = vld [vmem:[#allocation8 + $0x28] sm:$0xff]
    %v333 = vld [vmem:[#allocation8 + $0x30] sm:$0xff]
    %v334 = vld [vmem:[#allocation8 + $0x38] sm:$0xff]
    %v335 = vld [vmem:[#allocation8 + $0x40] sm:$0xff]
    %v336 = vld [vmem:[#allocation8 + $0x48] sm:$0xff]
    %v337 = vld [vmem:[#allocation8 + $0x50] sm:$0xff]
    %v338 = vld [vmem:[#allocation8 + $0x58] sm:$0xff]
    %v339 = vld [vmem:[#allocation8 + $0x60] sm:$0xff]
    %v340 = vld [vmem:[#allocation8 + $0x68] sm:$0xff]
    %v341 = vld [vmem:[#allocation8 + $0x70] sm:$0xff]
    %v342 = vld [vmem:[#allocation8 + $0x78] sm:$0xff]
    %v343 = vld [vmem:[#allocation8 + $0x80] sm:$0xff]
    %v344 = vld [vmem:[#allocation8 + $0x88] sm:$0xff]
    %v345 = vld [vmem:[#allocation8 + $0x90] sm:$0xff]
    %v346 = vld [vmem:[#allocation8 + $0x98] sm:$0xff]
    %v347 = vld [vmem:[#allocation8 + $0xa0] sm:$0xff]
    %v348 = vld [vmem:[#allocation8 + $0xa8] sm:$0xff]
    %v349 = vld [vmem:[#allocation8 + $0xb0] sm:$0xff]
    %v350 = vld [vmem:[#allocation8 + $0xb8] sm:$0xff]
    %v351 = vld [vmem:[#allocation8 + $0xc0] sm:$0xff]
    %v352 = vld [vmem:[#allocation8 + $0xc8] sm:$0xff]
    %v353 = vld [vmem:[#allocation8 + $0xd0] sm:$0xff]
    %v354 = vld [vmem:[#allocation8 + $0xd8] sm:$0xff]
    %v355 = vld [vmem:[#allocation8 + $0xe0] sm:$0xff]
    %v356 = vld [vmem:[#allocation8 + $0xe8] sm:$0xff]
    %v357 = vld [vmem:[#allocation8 + $0xf0] sm:$0xff]
    %v358 = vld [vmem:[#allocation8 + $0xf8] sm:$0xff]
    %v359 = vld [vmem:[%s6] sm:$0x3]
    %v361 = vlaneseq
    %v362 = vshrl.u32 %v361, 7
    %v363 = vsub.s32 0, %v362
    %v364 = vrot.slane %v359, %v363
    %v365 = vlaneseq
    %v366 = vshrl.u32 %v365, 7
    %v367 = vsub.s32 1, %v366
    %v368 = vrot.slane %v359, %v367
    %371 = vmatprep.subr.mxu0 %v358
    %372 = vmatpush1.msra.mxu0 %v357
    %373 = vmatprep.subr.mxu0 %v356
    %374 = vmatpush1.msra.mxu0 %v355
    %375 = vmatprep.subr.mxu0 %v354
    %376 = vmatpush1.msra.mxu0 %v353
    %377 = vmatprep.subr.mxu0 %v352
    %378 = vmatpush1.msra.mxu0 %v351
    %379 = vmatprep.subr.mxu0 %v350
    %380 = vmatpush1.msra.mxu0 %v349
    %381 = vmatprep.subr.mxu0 %v348
    %382 = vmatpush1.msra.mxu0 %v347
    %383 = vmatprep.subr.mxu0 %v346
    %384 = vmatpush1.msra.mxu0 %v345
    %385 = vmatprep.subr.mxu0 %v344
    %386 = vmatpush1.msra.mxu0 %v343
    %387 = vmatprep.subr.mxu0 %v342
    %388 = vmatpush1.msra.mxu0 %v341
    %389 = vmatprep.subr.mxu0 %v340
    %390 = vmatpush1.msra.mxu0 %v339
    %391 = vmatprep.subr.mxu0 %v338
    %392 = vmatpush1.msra.mxu0 %v337
    %393 = vmatprep.subr.mxu0 %v336
    %394 = vmatpush1.msra.mxu0 %v335
    %395 = vmatprep.subr.mxu0 %v334
    %396 = vmatpush1.msra.mxu0 %v333
    %397 = vmatprep.subr.mxu0 %v332
    %398 = vmatpush1.msra.mxu0 %v331
    %399 = vmatprep.subr.mxu0 %v330
    %400 = vmatpush1.msra.mxu0 %v329
    %401 = vmatprep.subr.mxu0 %v328
    %402 = vmatpush1.msra.mxu0 %v327
    %403 = vmatprep.subr.mxu0 0.0
    %404 = vmatpush2.msra.mxu0 0.0
    %405 = vmatprep.subr.mxu0 0.0
    %406 = vmatpush2.msra.mxu0 0.0
    %407 = vmatprep.subr.mxu0 0.0
    %408 = vmatpush2.msra.mxu0 0.0
    %409 = vmatprep.subr.mxu0 0.0
    %410 = vmatpush2.msra.mxu0 0.0
    %411 = vmatprep.subr.mxu0 0.0
    %412 = vmatpush2.msra.mxu0 0.0
    %413 = vmatprep.subr.mxu0 0.0
    %414 = vmatpush2.msra.mxu0 0.0
    %415 = vmatprep.subr.mxu0 0.0
    %416 = vmatpush2.msra.mxu0 0.0
    %417 = vmatprep.subr.mxu0 0.0
    %418 = vmatpush2.msra.mxu0 0.0
    %419 = vmatprep.subr.mxu0 0.0
    %420 = vmatpush2.msra.mxu0 0.0
    %421 = vmatprep.subr.mxu0 0.0
    %422 = vmatpush2.msra.mxu0 0.0
    %423 = vmatprep.subr.mxu0 0.0
    %424 = vmatpush2.msra.mxu0 0.0
    %425 = vmatprep.subr.mxu0 0.0
    %426 = vmatpush2.msra.mxu0 0.0
    %427 = vmatprep.subr.mxu0 0.0
    %428 = vmatpush2.msra.mxu0 0.0
    %429 = vmatprep.subr.mxu0 0.0
    %430 = vmatpush2.msra.mxu0 0.0
    %431 = vmatprep.subr.mxu0 0.0
    %432 = vmatpush2.msra.mxu0 0.0
    %433 = vmatprep.subr.mxu0 0.0
    %434 = vmatpush2.msra.mxu0 0.0
    %435 = vmatprep.mubr.f32.mxu0 0.0
    %436 = vmatmul.mubr.f32.gmra.mxu0 %v325
    %v437 = vpop.f32.mrf.mxu0
    %v438 = vadd.f32 %v364, %v437
    %v439 = vpop.f32.mrf.mxu0
    %v440 = vadd.f32 %v368, %v439
    %441 = vmatprep.mubr.f32.mxu0 0.0
    %442 = vmatmul.mubr.f32.gmra.mxu0 %v326
    %v443 = vpop.f32.mrf.mxu0
    %v444 = vadd.f32 %v364, %v443
    %v445 = vpop.f32.mrf.mxu0
    %v446 = vadd.f32 %v368, %v445
    %447 = vdwg.mxu0
    %448 = vmatprep.subr.mxu0 0.0
    %449 = vmatpush1.xpose.msra.mxu0 0.0
    %450 = vmatprep.subr.mxu0 0.0
    %451 = vmatpush1.xpose.msra.mxu0 0.0
    %452 = vmatprep.subr.mxu0 0.0
    %453 = vmatpush1.xpose.msra.mxu0 0.0
    %454 = vmatprep.subr.mxu0 0.0
    %455 = vmatpush1.xpose.msra.mxu0 0.0
    %456 = vmatprep.subr.mxu0 0.0
    %457 = vmatpush1.xpose.msra.mxu0 0.0
    %458 = vmatprep.subr.mxu0 0.0
    %459 = vmatpush1.xpose.msra.mxu0 0.0
    %460 = vmatprep.subr.mxu0 0.0
    %461 = vmatpush1.xpose.msra.mxu0 0.0
    %462 = vmatprep.subr.mxu0 0.0
    %463 = vmatpush1.xpose.msra.mxu0 0.0
    %464 = vmatprep.subr.mxu0 0.0
    %465 = vmatpush1.xpose.msra.mxu0 0.0
    %466 = vmatprep.subr.mxu0 0.0
    %467 = vmatpush1.xpose.msra.mxu0 0.0
    %468 = vmatprep.subr.mxu0 0.0
    %469 = vmatpush1.xpose.msra.mxu0 0.0
    %470 = vmatprep.subr.mxu0 0.0
    %471 = vmatpush1.xpose.msra.mxu0 0.0
    %472 = vmatprep.subr.mxu0 0.0
    %473 = vmatpush1.xpose.msra.mxu0 0.0
    %474 = vmatprep.subr.mxu0 0.0
    %475 = vmatpush1.xpose.msra.mxu0 0.0
    %476 = vmatprep.subr.mxu0 0.0
    %477 = vmatpush1.xpose.msra.mxu0 0.0
    %478 = vmatprep.subr.mxu0 0.0
    %479 = vmatpush1.xpose.msra.mxu0 %v440
    %480 = vmatprep.subr.mxu0 0.0
    %481 = vmatpush2.xpose.msra.mxu0 0.0
    %482 = vmatprep.subr.mxu0 0.0
    %483 = vmatpush2.xpose.msra.mxu0 0.0
    %484 = vmatprep.subr.mxu0 0.0
    %485 = vmatpush2.xpose.msra.mxu0 0.0
    %486 = vmatprep.subr.mxu0 0.0
    %487 = vmatpush2.xpose.msra.mxu0 0.0
    %488 = vmatprep.subr.mxu0 0.0
    %489 = vmatpush2.xpose.msra.mxu0 0.0
    %490 = vmatprep.subr.mxu0 0.0
    %491 = vmatpush2.xpose.msra.mxu0 0.0
    %492 = vmatprep.subr.mxu0 0.0
    %493 = vmatpush2.xpose.msra.mxu0 0.0
    %494 = vmatprep.subr.mxu0 0.0
    %495 = vmatpush2.xpose.msra.mxu0 0.0
    %496 = vmatprep.subr.mxu0 0.0
    %497 = vmatpush2.xpose.msra.mxu0 0.0
    %498 = vmatprep.subr.mxu0 0.0
    %499 = vmatpush2.xpose.msra.mxu0 0.0
    %500 = vmatprep.subr.mxu0 0.0
    %501 = vmatpush2.xpose.msra.mxu0 0.0
    %502 = vmatprep.subr.mxu0 0.0
    %503 = vmatpush2.xpose.msra.mxu0 0.0
    %504 = vmatprep.subr.mxu0 0.0
    %505 = vmatpush2.xpose.msra.mxu0 0.0
    %506 = vmatprep.subr.mxu0 0.0
    %507 = vmatpush2.xpose.msra.mxu0 0.0
    %508 = vmatprep.subr.mxu0 0.0
    %509 = vmatpush2.xpose.msra.mxu0 0.0
    %510 = vmatprep.subr.mxu0 0.0
    %511 = vmatpush2.xpose.msra.mxu0 0.0
    %512 = vmatprep.mubr.f32.mxu0 0.0
    %513 = vmatmul.mubr.f32.gmra.mxu0 %v438
    %v514 = vpop.f32.mrf.mxu0
    %v515 = vadd.f32 0.0, %v514
    %v516 = vpop.f32.mrf.mxu0
    %517 = vdwg.mxu0
    %518 = vmatprep.subr.mxu0 0.0
    %519 = vmatpush1.xpose.msra.mxu0 0.0
    %520 = vmatprep.subr.mxu0 0.0
    %521 = vmatpush1.xpose.msra.mxu0 0.0
    %522 = vmatprep.subr.mxu0 0.0
    %523 = vmatpush1.xpose.msra.mxu0 0.0
    %524 = vmatprep.subr.mxu0 0.0
    %525 = vmatpush1.xpose.msra.mxu0 0.0
    %526 = vmatprep.subr.mxu0 0.0
    %527 = vmatpush1.xpose.msra.mxu0 0.0
    %528 = vmatprep.subr.mxu0 0.0
    %529 = vmatpush1.xpose.msra.mxu0 0.0
    %530 = vmatprep.subr.mxu0 0.0
    %531 = vmatpush1.xpose.msra.mxu0 0.0
    %532 = vmatprep.subr.mxu0 0.0
    %533 = vmatpush1.xpose.msra.mxu0 0.0
    %534 = vmatprep.subr.mxu0 0.0
    %535 = vmatpush1.xpose.msra.mxu0 0.0
    %536 = vmatprep.subr.mxu0 0.0
    %537 = vmatpush1.xpose.msra.mxu0 0.0
    %538 = vmatprep.subr.mxu0 0.0
    %539 = vmatpush1.xpose.msra.mxu0 0.0
    %540 = vmatprep.subr.mxu0 0.0
    %541 = vmatpush1.xpose.msra.mxu0 0.0
    %542 = vmatprep.subr.mxu0 0.0
    %543 = vmatpush1.xpose.msra.mxu0 0.0
    %544 = vmatprep.subr.mxu0 0.0
    %545 = vmatpush1.xpose.msra.mxu0 0.0
    %546 = vmatprep.subr.mxu0 0.0
    %547 = vmatpush1.xpose.msra.mxu0 0.0
    %548 = vmatprep.subr.mxu0 0.0
    %549 = vmatpush1.xpose.msra.mxu0 %v446
    %550 = vmatprep.subr.mxu0 0.0
    %551 = vmatpush2.xpose.msra.mxu0 0.0
    %552 = vmatprep.subr.mxu0 0.0
    %553 = vmatpush2.xpose.msra.mxu0 0.0
    %554 = vmatprep.subr.mxu0 0.0
    %555 = vmatpush2.xpose.msra.mxu0 0.0
    %556 = vmatprep.subr.mxu0 0.0
    %557 = vmatpush2.xpose.msra.mxu0 0.0
    %558 = vmatprep.subr.mxu0 0.0
    %559 = vmatpush2.xpose.msra.mxu0 0.0
    %560 = vmatprep.subr.mxu0 0.0
    %561 = vmatpush2.xpose.msra.mxu0 0.0
    %562 = vmatprep.subr.mxu0 0.0
    %563 = vmatpush2.xpose.msra.mxu0 0.0
    %564 = vmatprep.subr.mxu0 0.0
    %565 = vmatpush2.xpose.msra.mxu0 0.0
    %566 = vmatprep.subr.mxu0 0.0
    %567 = vmatpush2.xpose.msra.mxu0 0.0
    %568 = vmatprep.subr.mxu0 0.0
    %569 = vmatpush2.xpose.msra.mxu0 0.0
    %570 = vmatprep.subr.mxu0 0.0
    %571 = vmatpush2.xpose.msra.mxu0 0.0
    %572 = vmatprep.subr.mxu0 0.0
    %573 = vmatpush2.xpose.msra.mxu0 0.0
    %574 = vmatprep.subr.mxu0 0.0
    %575 = vmatpush2.xpose.msra.mxu0 0.0
    %576 = vmatprep.subr.mxu0 0.0
    %577 = vmatpush2.xpose.msra.mxu0 0.0
    %578 = vmatprep.subr.mxu0 0.0
    %579 = vmatpush2.xpose.msra.mxu0 0.0
    %580 = vmatprep.subr.mxu0 0.0
    %581 = vmatpush2.xpose.msra.mxu0 0.0
    %582 = vmatprep.mubr.f32.mxu0 0.0
    %583 = vmatmul.mubr.f32.gmra.mxu0 %v444
    %v584 = vpop.f32.mrf.mxu0
    %v585 = vadd.f32 0.0, %v584
    %v586 = vpop.f32.mrf.mxu0
    %587 = vdwg.mxu0
    %v588 = vmul.f32 %v515, 0.088388346
    %v589 = vmul.f32 %v585, 0.088388346
    %v590 = vtanh.pop %v588
    %v591 = vtanh.pop %v589
    %v592 = vmul.f32 %v590, 10.0
    %v593 = vmul.f32 %v591, 10.0
    %v594 = vlaneseq
    %v595 = vshrl.u32 %v594, 7
    %v596 = vlaneseq
    %v597 = vand.u32 %v596, 127
    %vm598 = vcmp.eq.s32.totalorder %v595, %v597
    %v599 = vsub.f32 %v592, 1e+20
    %v600 = vsub.f32 %v593, 1e+20
    %v601 = vsel %vm598, %v599, %v592
    %v602 = vsel %vm598, %v600, %v593
    %vm603 = vcmask 64512
    %v604 = vsel %vm603, %v601, -inf
    %605 = vmax.xlane.f32.xlu0 %v604
    %v606 = vpop.xlane.xlu0 %605
    %v607 = vsel %vm603, %v602, -inf
    %608 = vmax.xlane.f32.xlu0 %v607
    %v609 = vpop.xlane.xlu0 %608
    %v610 = vrot.slane %v606, 4
    %v611 = vmax.f32 %v606, %v610
    %v612 = vrot.slane %v611, 2
    %v613 = vmax.f32 %v611, %v612
    %v614 = vrot.slane %v613, 1
    %v615 = vmax.f32 %v613, %v614
    %v616 = vrot.slane %v609, 4
    %v617 = vmax.f32 %v609, %v616
    %v618 = vrot.slane %v617, 2
    %v619 = vmax.f32 %v617, %v618
    %v620 = vrot.slane %v619, 1
    %v621 = vmax.f32 %v619, %v620
    %v622 = vsub.f32 %v601, %v615
    %v623 = vsub.f32 %v602, %v621
    %v624 = vmul.f32 %v622, 1.442695
    %v625 = vpow.pop %v624
    %v626 = vmul.f32 %v623, 1.442695
    %v627 = vpow.pop %v626
    %v628 = vsel %vm603, %v625, 0.0
    %629 = vadd.xlane.f32.xlu0 %v628
    %v630 = vpop.xlane.xlu0 %629
    %v631 = vsel %vm603, %v627, 0.0
    %632 = vadd.xlane.f32.xlu0 %v631
    %v633 = vpop.xlane.xlu0 %632
    %v634 = vrot.slane %v630, 4
    %v635 = vadd.f32 %v630, %v634
    %v636 = vrot.slane %v635, 2
    %v637 = vadd.f32 %v635, %v636
    %v638 = vrot.slane %v637, 1
    %v639 = vadd.f32 %v637, %v638
    %v640 = vrot.slane %v633, 4
    %v641 = vadd.f32 %v633, %v640
    %v642 = vrot.slane %v641, 2
    %v643 = vadd.f32 %v641, %v642
    %v644 = vrot.slane %v643, 1
    %v645 = vadd.f32 %v643, %v644
    %v646 = vrcp.pop %v639
    %v647 = vmul.f32 %v625, %v646
    %v648 = vrcp.pop %v645
    %v649 = vmul.f32 %v627, %v648
    %v652 = vrot.slane %v649, 7
    %v653 = vsel %vm121, %v652, %v647
    %vm655 = vcmask 58368
    %656 = vst.msk [vmem:[#allocation10] sm:$0x3] %vm655, %v653
    %vm657 = vcmask 1042434
    %v658 = vsel %vm657, %v652, %v647
    %659 = vrot.lane.b32.xlu0 %v658, 8
    %v660 = vpop.permute.xlu0 %659
    %vm662 = vcmask 124993
    %663 = vst.msk [vmem:[#allocation10 - $0x1] sm:$0x6] %vm662, %v660
    %vm664 = vcmask 1043459
    %v665 = vsel %vm664, %v652, %v647
    %666 = vrot.lane.b32.xlu0 %v665, 16
    %v667 = vpop.permute.xlu0 %666
    %vm669 = vcmask 191618
    %670 = vst.msk [vmem:[#allocation10 - $0x2] sm:$0xc] %vm669, %v667
    %vm671 = vcmask 1044484
    %v672 = vsel %vm671, %v652, %v647
    %673 = vrot.lane.b32.xlu0 %v672, 24
    %v674 = vpop.permute.xlu0 %673
    %vm676 = vcmask 258243
    %677 = vst.msk [vmem:[#allocation10 - $0x3] sm:$0x18] %vm676, %v674
    %vm678 = vcmask 1045509
    %v679 = vsel %vm678, %v652, %v647
    %680 = vrot.lane.b32.xlu0 %v679, 32
    %v681 = vpop.permute.xlu0 %680
    %vm683 = vcmask 324868
    %684 = vst.msk [vmem:[#allocation10 - $0x4] sm:$0x30] %vm683, %v681
    %vm685 = vcmask 1046534
    %v686 = vsel %vm685, %v652, %v647
    %687 = vrot.lane.b32.xlu0 %v686, 40
    %v688 = vpop.permute.xlu0 %687
    %vm690 = vcmask 391493
    %691 = vst.msk [vmem:[#allocation10 - $0x5] sm:$0x60] %vm690, %v688
    %vm692 = vcmask 1047559
    %v693 = vsel %vm692, %v652, %v647
    %694 = vrot.lane.b32.xlu0 %v693, 48
    %v695 = vpop.permute.xlu0 %694
    %vm697 = vcmask 458118
    %698 = vst.msk [vmem:[#allocation10 - $0x6] sm:$0xc0] %vm697, %v695
    %699 = vrot.lane.b32.xlu0 %v647, 56
    %v700 = vpop.permute.xlu0 %699
    %701 = vrot.lane.b32.xlu0 %v652, 56
    %v702 = vpop.permute.xlu0 %701
    %vm705 = vcmask 523719
    %706 = vst.msk [vmem:[#allocation10 - $0x7] sm:$0x80] %vm705, %v700
    %vm707 = vcmask 516544
    %708 = vst.msk [vmem:[#allocation10 + $0x1] sm:$0x1] %vm707, %v702
    // Predicated region
    $region46: #{tpu_custom_call.1} parent=1 // pred_check
      _
    $region47: #{tpu_custom_call.1} parent=1 // pred_check_branch
      %710 = sbr.rel (0) target = $region49
    $region48: #{tpu_custom_call.1} parent=1 // pred_region
      %s712 = ssub.s32 32, 32
      %713 = vsyncadd [#allocation4], %s712
      %s715 = sshll.u32 [#allocation10], 4
      %s716 = int_to_ptr.vmem [resolvable:$true] %s715
      %718 = dma.vmem_to_hbm [thread:$0]  %s716, 32, %s7, [#allocation4]
    $region49: #{tpu_custom_call.1} parent=1 // pred_fallthru
      _
    // Predicated region
    $region50: #{tpu_custom_call.1} parent=1 // pred_check
      _
    $region51: #{tpu_custom_call.1} parent=1 // pred_check_branch
      %720 = sbr.rel (0) target = $region53
    $region52: #{tpu_custom_call.1} parent=1 // pred_region
      %721 = dma.done [#allocation4], 32
    $region53: #{tpu_custom_call.1} parent=1 // pred_fallthru
      _
    %722 = vsyncpa [#allocation3], 1
    %723 = vsyncpa [#allocation6], 1
    %724 = vsyncpa [#allocation9], 1
    %725 = vsyncpa [#allocation4], 1

</llo_original>
